<compile_context>
chip_gen: v6e
topology: v6e:2x2x1
jax: 0.10.0
libtpu: 0.0.40
codegen_flags: <defaults>
</compile_context>

<pallas_src>
import jax
import jax.numpy as jnp
from jax.experimental import pallas as pl
from jax.experimental.pallas import tpu as pltpu

NEG_SLOPE = 0.01  # torch.nn.functional.leaky_relu default

NODE_TYPES = ["author", "paper", "term", "conference"]
NODE_IDX = {nt: i for i, nt in enumerate(NODE_TYPES)}
AUTHOR_IDX = NODE_IDX["author"]

# Edge types ordered so that edge types sharing a destination are consecutive
# (required for the accumulate-into-resident-slot pattern).
EDGE_TYPES = [
    ("paper", "to", "author"),
    ("author", "to", "paper"),
    ("term", "to", "paper"),
    ("conference", "to", "paper"),
    ("paper", "to", "term"),
    ("paper", "to", "conference"),
]


def round_up(x, m):
    return -(-x // m) * m


def pad_to(x, rows, cols):
    return jnp.pad(x, ((0, rows - x.shape[0]), (0, cols - x.shape[1])))


# ---------------------------------------------------------------------------
# Fused forward kernel: grid = (layer, edge_type)
# ---------------------------------------------------------------------------
def _fused_forward_kernel(src_r, dst_r, first_r, last_r,
                          x_ref, a_ref, w_ref, b_ref, lw_ref, lb_ref,
                          out_ref, buf_ref):
    """One grid step = one (layer, edge type).

    buf_ref is a ping-pong slab [2*n_types, N_PAD, D_PAD] (f32):
      slot parity `l % 2` holds this layer's inputs, `1 - l % 2` its outputs.
    Per edge type:
      contrib = concat([A @ x_src, x_dst], K) @ [W_l; W_r] + b_l
      first edge for dst  -> overwrite slot, others -> accumulate,
      last edge for dst   -> fused leaky_relu.
    Final grid step additionally computes the author Linear and writes out_ref.
    """
    l = pl.program_id(0)
    e = pl.program_id(1)
    n_types = x_ref.shape[0]

    cur = l % 2
    nxt = 1 - cur

    # Prime the ping-pong buffer with the packed input features (once).
    @pl.when((l == 0) & (e == 0))
    def _():
        buf_ref[pl.ds(0, n_types)] = x_ref[...]

    s = src_r[e]
    d = dst_r[e]

    xs = buf_ref[cur * n_types + s].astype(jnp.bfloat16)   # [N_PAD, D_PAD]
    xd = buf_ref[cur * n_types + d].astype(jnp.bfloat16)

    # mean aggregation as dense row-normalized adjacency (bf16 in, f32 acc)
    agg = jnp.dot(a_ref[...], xs, preferred_element_type=jnp.float32)
    # merged lin_l / lin_r matmul: one MXU push with K = 2*D_PAD
    cat = jnp.concatenate([agg.astype(jnp.bfloat16), xd], axis=1)
    contrib = jnp.dot(cat, w_ref[...], preferred_element_type=jnp.float32) + b_ref[...]

    dst_slot = nxt * n_types + d

    @pl.when(first_r[e] == 1)
    def _():
        buf_ref[dst_slot] = contrib

    @pl.when(first_r[e] == 0)
    def _():
        buf_ref[dst_slot] += contrib

    @pl.when(last_r[e] == 1)
    def _():
        v = buf_ref[dst_slot]
        buf_ref[dst_slot] = jnp.where(v >= 0.0, v, NEG_SLOPE * v)

    # Final-Linear epilogue on the very last grid step (author slab is complete:
    # its last contributing edge type is earlier in this layer's edge ordering).
    @pl.when((l == pl.num_programs(0) - 1) & (e == pl.num_programs(1) - 1))
    def _():
        xa = buf_ref[nxt * n_types + AUTHOR_IDX].astype(jnp.bfloat16)
        out_ref[...] = (jnp.dot(xa, lw_ref[...], preferred_element_type=jnp.float32)
                        + lb_ref[...])


def hetero_gnn_pallas(x_nodes, a_stack, w_all, b_all, lin_w, lin_b, meta):
    """Single pallas_call for the whole forward.

    x_nodes : [n_types, N_PAD, D_PAD] f32
    a_stack : [n_et, N_PAD, N_PAD]    bf16 (row-normalized adjacencies)
    w_all   : [L, n_et, 2*D_PAD, D_PAD] bf16 ([W_l; W_r] per layer/edge type)
    b_all   : [L, n_et, 1, D_PAD]     f32
    lin_w   : [D_PAD, O_PAD]          bf16
    lin_b   : [1, O_PAD]              f32
    returns : [N_PAD, O_PAD]          f32 (padded author logits)
    """
    src_i, dst_i, first_i, last_i = meta
    n_types, n_pad, d_pad = x_nodes.shape
    num_layers, n_et, k_pad, h_pad = w_all.shape
    o_pad = lin_w.shape[1]
    assert h_pad == d_pad and k_pad == 2 * d_pad

    grid_spec = pltpu.PrefetchScalarGridSpec(
        num_scalar_prefetch=4,
        grid=(num_layers, n_et),
        in_specs=[
            # packed input features (resident for the whole grid)
            pl.BlockSpec((n_types, n_pad, d_pad), lambda l, e, *_: (0, 0, 0)),
            # per-edge-type normalized adjacency (bf16)
            pl.BlockSpec((None, n_pad, n_pad), lambda l, e, *_: (e, 0, 0)),
            # per-layer/edge-type concatenated [W_l; W_r] (bf16)
            pl.BlockSpec((None, None, k_pad, h_pad), lambda l, e, *_: (l, e, 0, 0)),
            # per-layer/edge-type bias (f32)
            pl.BlockSpec((None, None, 1, h_pad), lambda l, e, *_: (l, e, 0, 0)),
            # final linear weight / bias (resident)
            pl.BlockSpec((h_pad, o_pad), lambda l, e, *_: (0, 0)),
            pl.BlockSpec((1, o_pad), lambda l, e, *_: (0, 0)),
        ],
        out_specs=pl.BlockSpec((n_pad, o_pad), lambda l, e, *_: (0, 0)),
        scratch_shapes=[pltpu.VMEM((2 * n_types, n_pad, d_pad), jnp.float32)],
    )
    return pl.pallas_call(
        _fused_forward_kernel,
        grid_spec=grid_spec,
        out_shape=jax.ShapeDtypeStruct((n_pad, o_pad), jnp.float32),
        compiler_params=pltpu.CompilerParams(
            dimension_semantics=("arbitrary", "arbitrary")),
    )(src_i, dst_i, first_i, last_i, x_nodes, a_stack, w_all, b_all, lin_w, lin_b)


# ---------------------------------------------------------------------------
# Parameter / input packing (padding + bf16 casts done once, outside kernels)
# ---------------------------------------------------------------------------
def build_norm_adj(edge_index, n_src, n_dst):
    """Dense row-normalized adjacency A[dst, src]; mean aggregation = A @ x_src."""
    src, dst = edge_index[0], edge_index[1]
    counts = jnp.zeros((n_dst, n_src), jnp.float32).at[dst, src].add(1.0)
    deg = counts.sum(axis=1, keepdims=True)
    return counts / jnp.maximum(deg, 1.0)  # zero in-degree rows stay zero


def init_params(key, in_dims, hidden, out_channels, num_layers):
    # SAGEConv((-1,-1), hidden): lin_l (src->hidden, bias), lin_r (dst->hidden, no bias)
    params = {"layers": []}
    for layer in range(num_layers):
        lp = {}
        for et in EDGE_TYPES:
            s, _, d = et
            d_src = in_dims[s] if layer == 0 else hidden
            d_dst = in_dims[d] if layer == 0 else hidden
            key, k1, k2, k3 = jax.random.split(key, 4)
            lp[et] = {
                "w_l": 0.1 * jax.random.normal(k1, (d_src, hidden), jnp.float32),
                "b_l": 0.1 * jax.random.normal(k2, (hidden,), jnp.float32),
                "w_r": 0.1 * jax.random.normal(k3, (d_dst, hidden), jnp.float32),
            }
        params["layers"].append(lp)
    key, k1, k2 = jax.random.split(key, 3)
    params["lin"] = {
        "w": 0.1 * jax.random.normal(k1, (hidden, out_channels), jnp.float32),
        "b": 0.1 * jax.random.normal(k2, (out_channels,), jnp.float32),
    }
    return params


def pack_params(params, c_pad, o_pad):
    ws_layers, bs_layers = [], []
    for lp in params["layers"]:
        ws, bs = [], []
        for et in EDGE_TYPES:
            p = lp[et]
            wl = pad_to(p["w_l"], c_pad, c_pad)
            wr = pad_to(p["w_r"], c_pad, c_pad)
            ws.append(jnp.concatenate([wl, wr], axis=0))               # [2*c_pad, c_pad]
            bs.append(jnp.pad(p["b_l"], (0, c_pad - p["b_l"].shape[0]))[None, :])
        ws_layers.append(jnp.stack(ws))
        bs_layers.append(jnp.stack(bs))
    w_all = jnp.stack(ws_layers).astype(jnp.bfloat16)                   # [L, 6, 2*c_pad, c_pad]
    b_all = jnp.stack(bs_layers).astype(jnp.float32)                    # [L, 6, 1, c_pad]
    lin_w = pad_to(params["lin"]["w"], c_pad, o_pad).astype(jnp.bfloat16)
    lin_b = jnp.pad(params["lin"]["b"],
                    (0, o_pad - params["lin"]["b"].shape[0]))[None, :].astype(jnp.float32)
    return w_all, b_all, lin_w, lin_b


def pack_inputs(x_dict, n_pad, d_pad):
    return jnp.stack([pad_to(x_dict[nt], n_pad, d_pad) for nt in NODE_TYPES])


def pack_adjacency(adj_dict, n_pad):
    return jnp.stack(
        [pad_to(adj_dict[et], n_pad, n_pad) for et in EDGE_TYPES]
    ).astype(jnp.bfloat16)


def edge_meta():
    src_i = [NODE_IDX[s] for (s, _, _) in EDGE_TYPES]
    dst_i = [NODE_IDX[d] for (_, _, d) in EDGE_TYPES]
    n = len(EDGE_TYPES)
    first = [1 if (i == 0 or dst_i[i] != dst_i[i - 1]) else 0 for i in range(n)]
    last = [1 if (i == n - 1 or dst_i[i] != dst_i[i + 1]) else 0 for i in range(n)]
    return (jnp.array(src_i, jnp.int32), jnp.array(dst_i, jnp.int32),
            jnp.array(first, jnp.int32), jnp.array(last, jnp.int32))


def build_forward(n_author, out_channels):
    def forward(x_nodes, a_stack, w_all, b_all, lin_w, lin_b, meta):
        y = hetero_gnn_pallas(x_nodes, a_stack, w_all, b_all, lin_w, lin_b, meta)
        return y[:n_author, :out_channels]
    return jax.jit(forward)


# Pure-JAX f32 reference for verification
def hetero_gnn_reference(x_dict, adj_dict, params):
    for layer_params in params["layers"]:
        out = {}
        for et in EDGE_TYPES:
            s, _, d = et
            p = layer_params[et]
            agg = adj_dict[et] @ x_dict[s]
            contrib = agg @ p["w_l"] + p["b_l"] + x_dict[d] @ p["w_r"]
            out[d] = contrib if d not in out else out[d] + contrib
        x_dict = {k: jnp.where(v >= 0, v, NEG_SLOPE * v) for k, v in out.items()}
    return x_dict["author"] @ params["lin"]["w"] + params["lin"]["b"]


if __name__ == "__main__":
    key = jax.random.PRNGKey(0)

    num_nodes = {"author": 16, "paper": 24, "term": 8, "conference": 8}
    in_dims = {"author": 16, "paper": 32, "term": 16, "conference": 8}
    hidden, out_channels, num_layers = 32, 4, 2
    num_edges = 48

    # node features
    x_dict = {}
    for nt in NODE_TYPES:
        key, k = jax.random.split(key)
        x_dict[nt] = jax.random.normal(k, (num_nodes[nt], in_dims[nt]), jnp.float32)

    # edge indices -> dense row-normalized adjacencies
    adj_dict = {}
    for et in EDGE_TYPES:
        s, _, d = et
        key, k1, k2 = jax.random.split(key, 3)
        srcs = jax.random.randint(k1, (num_edges,), 0, num_nodes[s])
        dsts = jax.random.randint(k2, (num_edges,), 0, num_nodes[d])
        edge_index = jnp.stack([srcs, dsts])
        adj_dict[et] = build_norm_adj(edge_index, num_nodes[s], num_nodes[d])

    params = init_params(key, in_dims, hidden, out_channels, num_layers)

    # padding: lane dims -> common 128 pad (so all layers share block shapes),
    # node counts -> multiple of 16 (bf16 sublanes)
    N_PAD = round_up(max(num_nodes.values()), 16)                       # 32
    C_PAD = max(round_up(max(in_dims.values()), 128),
                round_up(hidden, 128))                                  # 128
    O_PAD = round_up(out_channels, 128)                                 # 128

    x_nodes = pack_inputs(x_dict, N_PAD, C_PAD)                         # [4, 32, 128] f32
    a_stack = pack_adjacency(adj_dict, N_PAD)                           # [6, 32, 32] bf16
    w_all, b_all, lin_w, lin_b = pack_params(params, C_PAD, O_PAD)
    meta = edge_meta()

    forward = build_forward(num_nodes["author"], out_channels)
    out = forward(x_nodes, a_stack, w_all, b_all, lin_w, lin_b, meta)
    out = jax.block_until_ready(out)

    ref = hetero_gnn_reference(x_dict, adj_dict, params)
    assert out.shape == (num_nodes["author"], out_channels)
    # bf16 MXU inputs with f32 accumulation -> small deviation vs f32 reference
    assert jnp.allclose(out, ref, atol=5e-2, rtol=5e-2), (
        float(jnp.max(jnp.abs(out - ref))))

    print("KERNEL_OK")
</pallas_src>

<mosaic_0001>
module attributes {stable_mosaic.version = 11 : i64} {
  func.func @_fused_forward_kernel(%arg0: i32, %arg1: i32, %arg2: memref<6xi32, #tpu.memory_space<smem>>, %arg3: memref<6xi32, #tpu.memory_space<smem>>, %arg4: memref<6xi32, #tpu.memory_space<smem>>, %arg5: memref<6xi32, #tpu.memory_space<smem>>, %arg6: memref<4x32x128xf32, #tpu.memory_space<vmem>>, %arg7: memref<1x32x32xbf16, #tpu.memory_space<vmem>>, %arg8: memref<1x1x256x128xbf16, #tpu.memory_space<vmem>>, %arg9: memref<1x1x1x128xf32, #tpu.memory_space<vmem>>, %arg10: memref<128x128xbf16, #tpu.memory_space<vmem>>, %arg11: memref<1x128xf32, #tpu.memory_space<vmem>>, %arg12: memref<32x128xf32, #tpu.memory_space<vmem>>, %arg13: memref<8x32x128xf32, #tpu.memory_space<vmem>>) attributes {dimension_semantics = [#tpu.dimension_semantics<arbitrary>, #tpu.dimension_semantics<arbitrary>], iteration_bounds = array<i64: 2, 6>, scalar_prefetch = 4 : i64, scratch_operands = 1 : i64, tpu.core_type = #tpu.core_type<tc>, window_params = [{pipeline_mode = #tpu.pipeline_mode<synchronous>, transform_indices = @transform_0, window_bounds = array<i64: 4, 32, 128>}, {transform_indices = @transform_1, window_bounds = array<i64: 1, 32, 32>}, {transform_indices = @transform_2, window_bounds = array<i64: 1, 1, 256, 128>}, {transform_indices = @transform_3, window_bounds = array<i64: 1, 1, 1, 128>}, {pipeline_mode = #tpu.pipeline_mode<synchronous>, transform_indices = @transform_4, window_bounds = array<i64: 128, 128>}, {pipeline_mode = #tpu.pipeline_mode<synchronous>, transform_indices = @transform_5, window_bounds = array<i64: 1, 128>}, {pipeline_mode = #tpu.pipeline_mode<synchronous>, transform_indices = @transform_6, window_bounds = array<i64: 32, 128>}]} {
    %c2_i32 = arith.constant 2 : i32
    %c0_i32 = arith.constant 0 : i32
    %0 = arith.cmpi eq, %c2_i32, %c0_i32 : i32
    %c1_i32 = arith.constant 1 : i32
    %1 = arith.select %0, %c1_i32, %c2_i32 : i32
    %2 = arith.remsi %arg0, %1 : i32
    %c0_i32_0 = arith.constant 0 : i32
    %3 = arith.cmpi ne, %2, %c0_i32_0 : i32
    %c0_i32_1 = arith.constant 0 : i32
    %4 = arith.cmpi slt, %2, %c0_i32_1 : i32
    %c0_i32_2 = arith.constant 0 : i32
    %5 = arith.cmpi slt, %1, %c0_i32_2 : i32
    %6 = arith.xori %4, %5 : i1
    %7 = arith.andi %6, %3 : i1
    %8 = arith.addi %2, %1 : i32
    %9 = arith.select %7, %8, %2 : i32
    %c1_i32_3 = arith.constant 1 : i32
    %10 = arith.subi %c1_i32_3, %9 : i32
    %c0_i32_4 = arith.constant 0 : i32
    %11 = arith.cmpi eq, %arg0, %c0_i32_4 : i32
    %c0_i32_5 = arith.constant 0 : i32
    %12 = arith.cmpi eq, %arg1, %c0_i32_5 : i32
    %13 = arith.andi %11, %12 : i1
    %14 = arith.extui %13 : i1 to i32
    %c0_i32_6 = arith.constant 0 : i32
    %15 = arith.cmpi ne, %14, %c0_i32_6 : i32
    scf.if %15 {
      %c0_32 = arith.constant 0 : index
      %c0_33 = arith.constant 0 : index
      %c0_34 = arith.constant 0 : index
      %66 = vector.load %arg6[%c0_32, %c0_33, %c0_34] : memref<4x32x128xf32, #tpu.memory_space<vmem>>, vector<4x32x128xf32>
      %c0_35 = arith.constant 0 : index
      %c0_36 = arith.constant 0 : index
      %c0_37 = arith.constant 0 : index
      %67 = vector.load %arg13[%c0_35, %c0_36, %c0_37] : memref<8x32x128xf32, #tpu.memory_space<vmem>>, vector<4x32x128xf32>
      tpu.vector_store %arg13[%c0_35, %c0_36, %c0_37], %66 {strides = array<i32>} : memref<8x32x128xf32, #tpu.memory_space<vmem>>, vector<4x32x128xf32>,
    } else {
    }
    %16 = arith.index_cast %arg1 : i32 to index
    %17 = memref.load %arg2[%16] : memref<6xi32, #tpu.memory_space<smem>>
    %18 = arith.index_cast %arg1 : i32 to index
    %19 = memref.load %arg3[%18] : memref<6xi32, #tpu.memory_space<smem>>
    %c4_i32 = arith.constant 4 : i32
    %20 = arith.muli %9, %c4_i32 : i32
    %21 = arith.addi %20, %17 : i32
    %22 = arith.index_cast %21 : i32 to index
    %c0 = arith.constant 0 : index
    %c0_7 = arith.constant 0 : index
    %23 = vector.load %arg13[%22, %c0, %c0_7] : memref<8x32x128xf32, #tpu.memory_space<vmem>>, vector<1x32x128xf32>
    %24 = vector.shape_cast %23 : vector<1x32x128xf32> to vector<32x128xf32>
    %25 = arith.truncf %24 : vector<32x128xf32> to vector<32x128xbf16>
    %c4_i32_8 = arith.constant 4 : i32
    %26 = arith.muli %9, %c4_i32_8 : i32
    %27 = arith.addi %26, %19 : i32
    %28 = arith.index_cast %27 : i32 to index
    %c0_9 = arith.constant 0 : index
    %c0_10 = arith.constant 0 : index
    %29 = vector.load %arg13[%28, %c0_9, %c0_10] : memref<8x32x128xf32, #tpu.memory_space<vmem>>, vector<1x32x128xf32>
    %30 = vector.shape_cast %29 : vector<1x32x128xf32> to vector<32x128xf32>
    %31 = arith.truncf %30 : vector<32x128xf32> to vector<32x128xbf16>
    %c0_11 = arith.constant 0 : index
    %c0_12 = arith.constant 0 : index
    %c0_13 = arith.constant 0 : index
    %32 = vector.load %arg7[%c0_11, %c0_12, %c0_13] : memref<1x32x32xbf16, #tpu.memory_space<vmem>>, vector<1x32x32xbf16>
    %33 = vector.shape_cast %32 : vector<1x32x32xbf16> to vector<32x32xbf16>
    %cst = arith.constant dense<0.000000e+00> : vector<32x128xf32>
    %34 = tpu.matmul %33, %25, %cst {dimension_numbers = #tpu.dot_dimension_numbers<[1], [0], [0], [1], [0, 0, 1, 1], [], []>} : vector<32x32xbf16>, vector<32x128xbf16>, vector<32x128xf32> -> vector<32x128xf32>
    %35 = arith.truncf %34 : vector<32x128xf32> to vector<32x128xbf16>
    %36 = tpu.concatenate %35, %31 in 1 : vector<32x128xbf16>, vector<32x128xbf16> -> vector<32x256xbf16>
    %c0_14 = arith.constant 0 : index
    %c0_15 = arith.constant 0 : index
    %c0_16 = arith.constant 0 : index
    %c0_17 = arith.constant 0 : index
    %37 = vector.load %arg8[%c0_14, %c0_15, %c0_16, %c0_17] : memref<1x1x256x128xbf16, #tpu.memory_space<vmem>>, vector<1x1x256x128xbf16>
    %38 = vector.shape_cast %37 : vector<1x1x256x128xbf16> to vector<256x128xbf16>
    %cst_18 = arith.constant dense<0.000000e+00> : vector<32x128xf32>
    %39 = tpu.matmul %36, %38, %cst_18 {dimension_numbers = #tpu.dot_dimension_numbers<[1], [0], [0], [1], [0, 0, 1, 1], [], []>} : vector<32x256xbf16>, vector<256x128xbf16>, vector<32x128xf32> -> vector<32x128xf32>
    %c0_19 = arith.constant 0 : index
    %c0_20 = arith.constant 0 : index
    %c0_21 = arith.constant 0 : index
    %c0_22 = arith.constant 0 : index
    %40 = vector.load %arg9[%c0_19, %c0_20, %c0_21, %c0_22] : memref<1x1x1x128xf32, #tpu.memory_space<vmem>>, vector<1x1x1x128xf32>
    %41 = vector.shape_cast %40 : vector<1x1x1x128xf32> to vector<1x128xf32>
    %42 = vector.broadcast %41 : vector<1x128xf32> to vector<32x128xf32>
    %43 = arith.addf %39, %42 : vector<32x128xf32>
    %c4_i32_23 = arith.constant 4 : i32
    %44 = arith.muli %10, %c4_i32_23 : i32
    %45 = arith.addi %44, %19 : i32
    %46 = arith.index_cast %arg1 : i32 to index
    %47 = memref.load %arg4[%46] : memref<6xi32, #tpu.memory_space<smem>>
    %c1_i32_24 = arith.constant 1 : i32
    %48 = arith.cmpi eq, %47, %c1_i32_24 : i32
    %49 = arith.extui %48 : i1 to i32
    %c0_i32_25 = arith.constant 0 : i32
    %50 = arith.cmpi ne, %49, %c0_i32_25 : i32
    scf.if %50 {
      %66 = arith.index_cast %45 : i32 to index
      %c0_32 = arith.constant 0 : index
      %c0_33 = arith.constant 0 : index
      %67 = vector.load %arg13[%66, %c0_32, %c0_33] : memref<8x32x128xf32, #tpu.memory_space<vmem>>, vector<1x32x128xf32>
      %68 = vector.shape_cast %67 : vector<1x32x128xf32> to vector<32x128xf32>
      %69 = vector.shape_cast %43 : vector<32x128xf32> to vector<1x32x128xf32>
      tpu.vector_store %arg13[%66, %c0_32, %c0_33], %69 {strides = array<i32>} : memref<8x32x128xf32, #tpu.memory_space<vmem>>, vector<1x32x128xf32>,
    } else {
    }
    %51 = arith.index_cast %arg1 : i32 to index
    %52 = memref.load %arg4[%51] : memref<6xi32, #tpu.memory_space<smem>>
    %c0_i32_26 = arith.constant 0 : i32
    %53 = arith.cmpi eq, %52, %c0_i32_26 : i32
    %54 = arith.extui %53 : i1 to i32
    %c0_i32_27 = arith.constant 0 : i32
    %55 = arith.cmpi ne, %54, %c0_i32_27 : i32
    scf.if %55 {
      %66 = arith.index_cast %45 : i32 to index
      %c0_32 = arith.constant 0 : index
      %c0_33 = arith.constant 0 : index
      %67 = vector.load %arg13[%66, %c0_32, %c0_33] : memref<8x32x128xf32, #tpu.memory_space<vmem>>, vector<1x32x128xf32>
      %68 = vector.shape_cast %67 : vector<1x32x128xf32> to vector<32x128xf32>
      %69 = arith.addf %68, %43 : vector<32x128xf32>
      %70 = arith.index_cast %45 : i32 to index
      %c0_34 = arith.constant 0 : index
      %c0_35 = arith.constant 0 : index
      %71 = vector.load %arg13[%70, %c0_34, %c0_35] : memref<8x32x128xf32, #tpu.memory_space<vmem>>, vector<1x32x128xf32>
      %72 = vector.shape_cast %71 : vector<1x32x128xf32> to vector<32x128xf32>
      %73 = vector.shape_cast %69 : vector<32x128xf32> to vector<1x32x128xf32>
      tpu.vector_store %arg13[%70, %c0_34, %c0_35], %73 {strides = array<i32>} : memref<8x32x128xf32, #tpu.memory_space<vmem>>, vector<1x32x128xf32>,
    } else {
    }
    %56 = arith.index_cast %arg1 : i32 to index
    %57 = memref.load %arg5[%56] : memref<6xi32, #tpu.memory_space<smem>>
    %c1_i32_28 = arith.constant 1 : i32
    %58 = arith.cmpi eq, %57, %c1_i32_28 : i32
    %59 = arith.extui %58 : i1 to i32
    %c0_i32_29 = arith.constant 0 : i32
    %60 = arith.cmpi ne, %59, %c0_i32_29 : i32
    scf.if %60 {
      %66 = arith.index_cast %45 : i32 to index
      %c0_32 = arith.constant 0 : index
      %c0_33 = arith.constant 0 : index
      %67 = vector.load %arg13[%66, %c0_32, %c0_33] : memref<8x32x128xf32, #tpu.memory_space<vmem>>, vector<1x32x128xf32>
      %68 = vector.shape_cast %67 : vector<1x32x128xf32> to vector<32x128xf32>
      %cst_34 = arith.constant 0.000000e+00 : f32
      %69 = vector.broadcast %cst_34 : f32 to vector<32x128xf32>
      %70 = arith.cmpf oge, %68, %69 : vector<32x128xf32>
      %cst_35 = arith.constant 0.00999999977 : f32
      %71 = vector.broadcast %cst_35 : f32 to vector<32x128xf32>
      %72 = arith.mulf %71, %68 : vector<32x128xf32>
      %73 = arith.select %70, %68, %72 : vector<32x128xi1>, vector<32x128xf32>
      %74 = arith.index_cast %45 : i32 to index
      %c0_36 = arith.constant 0 : index
      %c0_37 = arith.constant 0 : index
      %75 = vector.load %arg13[%74, %c0_36, %c0_37] : memref<8x32x128xf32, #tpu.memory_space<vmem>>, vector<1x32x128xf32>
      %76 = vector.shape_cast %75 : vector<1x32x128xf32> to vector<32x128xf32>
      %77 = vector.shape_cast %73 : vector<32x128xf32> to vector<1x32x128xf32>
      tpu.vector_store %arg13[%74, %c0_36, %c0_37], %77 {strides = array<i32>} : memref<8x32x128xf32, #tpu.memory_space<vmem>>, vector<1x32x128xf32>,
    } else {
    }
    %c1_i32_30 = arith.constant 1 : i32
    %61 = arith.cmpi eq, %arg0, %c1_i32_30 : i32
    %c5_i32 = arith.constant 5 : i32
    %62 = arith.cmpi eq, %arg1, %c5_i32 : i32
    %63 = arith.andi %61, %62 : i1
    %64 = arith.extui %63 : i1 to i32
    %c0_i32_31 = arith.constant 0 : i32
    %65 = arith.cmpi ne, %64, %c0_i32_31 : i32
    scf.if %65 {
      %c4_i32_32 = arith.constant 4 : i32
      %66 = arith.muli %10, %c4_i32_32 : i32
      %c0_i32_33 = arith.constant 0 : i32
      %67 = arith.addi %66, %c0_i32_33 : i32
      %68 = arith.index_cast %67 : i32 to index
      %c0_34 = arith.constant 0 : index
      %c0_35 = arith.constant 0 : index
      %69 = vector.load %arg13[%68, %c0_34, %c0_35] : memref<8x32x128xf32, #tpu.memory_space<vmem>>, vector<1x32x128xf32>
      %70 = vector.shape_cast %69 : vector<1x32x128xf32> to vector<32x128xf32>
      %71 = arith.truncf %70 : vector<32x128xf32> to vector<32x128xbf16>
      %c0_36 = arith.constant 0 : index
      %c0_37 = arith.constant 0 : index
      %72 = vector.load %arg10[%c0_36, %c0_37] : memref<128x128xbf16, #tpu.memory_space<vmem>>, vector<128x128xbf16>
      %cst_38 = arith.constant dense<0.000000e+00> : vector<32x128xf32>
      %73 = tpu.matmul %71, %72, %cst_38 {dimension_numbers = #tpu.dot_dimension_numbers<[1], [0], [0], [1], [0, 0, 1, 1], [], []>} : vector<32x128xbf16>, vector<128x128xbf16>, vector<32x128xf32> -> vector<32x128xf32>
      %c0_39 = arith.constant 0 : index
      %c0_40 = arith.constant 0 : index
      %74 = vector.load %arg11[%c0_39, %c0_40] : memref<1x128xf32, #tpu.memory_space<vmem>>, vector<1x128xf32>
      %75 = vector.broadcast %74 : vector<1x128xf32> to vector<32x128xf32>
      %76 = arith.addf %73, %75 : vector<32x128xf32>
      %c0_41 = arith.constant 0 : index
      %c0_42 = arith.constant 0 : index
      %77 = vector.load %arg12[%c0_41, %c0_42] : memref<32x128xf32, #tpu.memory_space<vmem>>, vector<32x128xf32>
      tpu.vector_store %arg12[%c0_41, %c0_42], %76 {strides = array<i32>} : memref<32x128xf32, #tpu.memory_space<vmem>>, vector<32x128xf32>,
    } else {
    }
    return
  }
  func.func @transform_0(%arg0: i32, %arg1: i32, %arg2: memref<6xi32, #tpu.memory_space<smem>>, %arg3: memref<6xi32, #tpu.memory_space<smem>>, %arg4: memref<6xi32, #tpu.memory_space<smem>>, %arg5: memref<6xi32, #tpu.memory_space<smem>>) -> (i32, i32, i32) {
    %c0_i32 = arith.constant 0 : i32
    %c0_i32_0 = arith.constant 0 : i32
    %c0_i32_1 = arith.constant 0 : i32
    %c0_i32_2 = arith.constant 0 : i32
    return %c0_i32, %c0_i32_0, %c0_i32_1 : i32, i32, i32
  }
  func.func @transform_1(%arg0: i32, %arg1: i32, %arg2: memref<6xi32, #tpu.memory_space<smem>>, %arg3: memref<6xi32, #tpu.memory_space<smem>>, %arg4: memref<6xi32, #tpu.memory_space<smem>>, %arg5: memref<6xi32, #tpu.memory_space<smem>>) -> (i32, i32, i32) {
    %c0_i32 = arith.constant 0 : i32
    %c0_i32_0 = arith.constant 0 : i32
    %c0_i32_1 = arith.constant 0 : i32
    return %arg1, %c0_i32, %c0_i32_0 : i32, i32, i32
  }
  func.func @transform_2(%arg0: i32, %arg1: i32, %arg2: memref<6xi32, #tpu.memory_space<smem>>, %arg3: memref<6xi32, #tpu.memory_space<smem>>, %arg4: memref<6xi32, #tpu.memory_space<smem>>, %arg5: memref<6xi32, #tpu.memory_space<smem>>) -> (i32, i32, i32, i32) {
    %c0_i32 = arith.constant 0 : i32
    %c0_i32_0 = arith.constant 0 : i32
    %c0_i32_1 = arith.constant 0 : i32
    return %arg0, %arg1, %c0_i32, %c0_i32_0 : i32, i32, i32, i32
  }
  func.func @transform_3(%arg0: i32, %arg1: i32, %arg2: memref<6xi32, #tpu.memory_space<smem>>, %arg3: memref<6xi32, #tpu.memory_space<smem>>, %arg4: memref<6xi32, #tpu.memory_space<smem>>, %arg5: memref<6xi32, #tpu.memory_space<smem>>) -> (i32, i32, i32, i32) {
    %c0_i32 = arith.constant 0 : i32
    %c0_i32_0 = arith.constant 0 : i32
    %c0_i32_1 = arith.constant 0 : i32
    return %arg0, %arg1, %c0_i32, %c0_i32_0 : i32, i32, i32, i32
  }
  func.func @transform_4(%arg0: i32, %arg1: i32, %arg2: memref<6xi32, #tpu.memory_space<smem>>, %arg3: memref<6xi32, #tpu.memory_space<smem>>, %arg4: memref<6xi32, #tpu.memory_space<smem>>, %arg5: memref<6xi32, #tpu.memory_space<smem>>) -> (i32, i32) {
    %c0_i32 = arith.constant 0 : i32
    %c0_i32_0 = arith.constant 0 : i32
    %c0_i32_1 = arith.constant 0 : i32
    return %c0_i32, %c0_i32_0 : i32, i32
  }
  func.func @transform_5(%arg0: i32, %arg1: i32, %arg2: memref<6xi32, #tpu.memory_space<smem>>, %arg3: memref<6xi32, #tpu.memory_space<smem>>, %arg4: memref<6xi32, #tpu.memory_space<smem>>, %arg5: memref<6xi32, #tpu.memory_space<smem>>) -> (i32, i32) {
    %c0_i32 = arith.constant 0 : i32
    %c0_i32_0 = arith.constant 0 : i32
    %c0_i32_1 = arith.constant 0 : i32
    return %c0_i32, %c0_i32_0 : i32, i32
  }
  func.func @transform_6(%arg0: i32, %arg1: i32, %arg2: memref<6xi32, #tpu.memory_space<smem>>, %arg3: memref<6xi32, #tpu.memory_space<smem>>, %arg4: memref<6xi32, #tpu.memory_space<smem>>, %arg5: memref<6xi32, #tpu.memory_space<smem>>) -> (i32, i32) {
    %c0_i32 = arith.constant 0 : i32
    %c0_i32_0 = arith.constant 0 : i32
    %c0_i32_1 = arith.constant 0 : i32
    return %c0_i32, %c0_i32_0 : i32, i32
  }
}

</mosaic_0001>

<llo_original>
// kernel: forward.1
$region0: #{forward.1}
  #allocation0 [shape = 'u32[]', space=smem, size = 0x4, offset = 0x4, fixed_abs, tag = 'smem constant byte address 0x4 - core index']
  #allocation1 [shape = 'u32[144,128]{1,0:T(1,128)}', space=vmem, size = 0x12000, scoped, tag = 'internal scratch']
  #allocation2 [shape = 'f32[8,32,128]{2,1,0:T(8,128)}', space=vmem, size = 0x20000, scoped, tag = 'scratch operand']
  #allocation3 [shape = 's32[1]{0}', space=sflag, size = 0x4, scoped, tag = 'scoped memory for forward.1']
  #allocation4 [shape = 'u8[512]{0}', space=smem, size = 0x200, scoped, tag = 'prefetched SMEM operand 0']
  #allocation5 [shape = 'u8[512]{0}', space=smem, size = 0x200, scoped, tag = 'prefetched SMEM operand 1']
  #allocation6 [shape = 'u8[512]{0}', space=smem, size = 0x200, scoped, tag = 'prefetched SMEM operand 2']
  #allocation7 [shape = 'u8[512]{0}', space=smem, size = 0x200, scoped, tag = 'prefetched SMEM operand 3']
  %s0 = inlined_call_operand.vmem [shape: s32[6], index: 0, kind: input, shape index: {}]
  %s1 = inlined_call_operand.vmem [shape: s32[6], index: 1, kind: input, shape index: {}]
  %s2 = inlined_call_operand.vmem [shape: s32[6], index: 2, kind: input, shape index: {}]
  %s3 = inlined_call_operand.vmem [shape: s32[6], index: 3, kind: input, shape index: {}]
  %s4 = inlined_call_operand.hbm [shape: f32[4,32,128], index: 4, kind: input, shape index: {}]
  %s5 = inlined_call_operand.hbm [shape: bf16[6,32,32], index: 5, kind: input, shape index: {}]
  %s6 = inlined_call_operand.hbm [shape: bf16[2,6,256,128], index: 6, kind: input, shape index: {}]
  %s7 = inlined_call_operand.hbm [shape: f32[2,6,1,128], index: 7, kind: input, shape index: {}]
  %s8 = inlined_call_operand.hbm [shape: bf16[128,128], index: 8, kind: input, shape index: {}]
  %s9 = inlined_call_operand.vmem [shape: f32[1,128], index: 9, kind: input, shape index: {}]
  %s10 = inlined_call_operand.vmem [shape: f32[32,128], index: 10, kind: output, shape index: {}]
  %s11 = sld [smem:[#allocation0]]
  $region97: #{forward.1} parent=0
    _
  %s13 = ssub.s32 1, %s11
  %s14 = scalar_select 0, %s13, %s11
  %s15 = sshll.u32 %s0, 4
  %s16 = int_to_ptr.vmem [resolvable:$true] %s15
  %18 = dma.vmem_to_smem %s16, 16, [#allocation4], [#allocation3]
  %s19 = sshll.u32 %s1, 4
  %s20 = int_to_ptr.vmem [resolvable:$true] %s19
  %22 = dma.vmem_to_smem %s20, 16, [#allocation5], [#allocation3]
  %s23 = sshll.u32 %s2, 4
  %s24 = int_to_ptr.vmem [resolvable:$true] %s23
  %26 = dma.vmem_to_smem %s24, 16, [#allocation6], [#allocation3]
  %s27 = sshll.u32 %s3, 4
  %s28 = int_to_ptr.vmem [resolvable:$true] %s27
  %30 = dma.vmem_to_smem %s28, 16, [#allocation7], [#allocation3]
  %31 = dma.done [#allocation3], 64
  %32 = sfence
  $region1: #{forward.1} parent=0
    #allocation8 [shape = 'u8[65536]{0}', space=vmem, size = 0x10000, scoped, tag = 'input window, operand 4, single buffered']
    #allocation9 [shape = 's32[2]{0}', space=sflag, size = 0x8, scoped, tag = 'scoped memory for forward.1']
    #allocation10 [shape = 'u8[16384]{0}', space=vmem, size = 0x4000, scoped, tag = 'input window, operand 5']
    #allocation11 [shape = 's32[2]{0}', space=sflag, size = 0x8, scoped, tag = 'scoped memory for forward.1']
    #allocation12 [shape = 'u8[131072]{0}', space=vmem, size = 0x20000, scoped, tag = 'input window, operand 6']
    #allocation13 [shape = 'u8[1024]{0}', space=vmem, size = 0x400, scoped, tag = 'input window, operand 7']
    #allocation14 [shape = 's32[2]{0}', space=sflag, size = 0x8, scoped, tag = 'scoped memory for forward.1']
    #allocation15 [shape = 'u8[32768]{0}', space=vmem, size = 0x8000, scoped, tag = 'input window, operand 8, single buffered']
    %33 = vsyncpa [#allocation9], 0
    %34 = vsyncpa [#allocation11], 0
    %s35 = scalar_lea.sflag [#allocation11], 1
    %36 = vsyncpa %s35, 0
    %37 = vsyncpa [#allocation14], 0
    %s38 = scalar_lea.sflag [#allocation14], 1
    %39 = vsyncpa %s38, 0
    loop: start=0, step=1, limit=14
    $region2: #{forward.1} parent=1 // loop_pre_header
      _
    $region3: #{forward.1} parent=1 // loop_header
      %s41 = sphi 0, %s45
      %p42 = scmp.ge.s32.totalorder %s41, 14
      %s48 = sphi 0, %s60
      %s49 = sphi 0, %s56
      %s50 = sphi 0, %s48
      %s51 = sphi 0, %s49
      %s52 = sphi 0, %s50
      %s53 = sphi 0, %s51
      %s61 = sphi 0, %s61
      %s63 = sphi 0, %s61
      %s64 = sphi 0, %s63
      %s78 = sphi 0, %s64
      %s84 = sphi 0, %s86
      %s87 = sphi 0, %s84
      %s88 = sphi 0, %s87
      %s104 = sphi 0, %s88
      %s112 = sphi 0, %s114
      %s115 = sphi 0, %s112
      %s116 = sphi 0, %s115
      %s132 = sphi 0, %s116
      %s140 = sphi 0, %s142
      %s143 = sphi 0, %s140
      %s144 = sphi 0, %s143
      %s160 = sphi 0, %s144
      %s164 = sphi 0, %s164
      %s166 = sphi 0, %s164
      %s167 = sphi 0, %s166
      %s181 = sphi 0, %s167
      %s185 = sphi 0, %s185
      %s187 = sphi 0, %s185
      %s188 = sphi 0, %s187
      %s202 = sphi 0, %s188
      %s206 = sphi 0, %s206
      %s208 = sphi 0, %s206
      %s209 = sphi 0, %s208
      %s223 = sphi 0, %s209
    $region4: #{forward.1} parent=1 // loop_header_branch
      %44 = sbr.rel (%p42) target = $region8
    $region5: #{forward.1} parent=1 // loop_body
      %s46 = ssub.s32 %s41, 1
      %s47 = ssub.s32 %s41, 2
      %s54 = sadd.s32 1, %s49
      %p55 = scmp.ge.s32.totalorder %s54, 6
      %s56 = scalar_select %p55, 0, %s54
      %s57 = sadd.s32 1, %s48
      %s58 = scalar_select %p55, %s57, %s48
      %p59 = scmp.ge.s32.totalorder %s58, 2
      %s60 = scalar_select %p59, 0, %s58
      %s62 = sadd.s32 %s61, 1
      %p65 = scmp.eq.s32.totalorder %s41, 11
      %p66 = scmp.ne.s32.totalorder %s61, %s63
      %p67 = scmp.eq.s32.totalorder %s41, 0
      %p68 = por %p66, %p67
      %p69 = scmp.ne.s32.totalorder %s61, %s63
      %p70 = scmp.eq.s32.totalorder %s46, 11
      %p71 = por %p69, %p70
      %p72 = scmp.ne.s32.totalorder %s63, %s64
      %p73 = scmp.eq.s32.totalorder %s46, 0
      %p74 = por %p72, %p73
      %p75 = scmp.ne.s32.totalorder %s63, %s64
      %p76 = scmp.eq.s32.totalorder %s47, 11
      %p77 = por %p75, %p76
      %p79 = scmp.ne.s32.totalorder %s64, %s78
      %p80 = scmp.eq.s32.totalorder %s47, 0
      %p81 = por %p79, %p80
      %s82 = ssub.s32 %s49, %s56
      %p83 = scmp.eq.s32.totalorder %s82, 0
      %s85 = sadd.s32 %s84, 1
      %s86 = scalar_select %p83, %s84, %s85
      %p89 = pneg %p83
      %p90 = scmp.eq.s32.totalorder %s41, 11
      %p91 = por %p89, %p90
      %p92 = scmp.ne.s32.totalorder %s84, %s87
      %p93 = scmp.eq.s32.totalorder %s41, 0
      %p94 = por %p92, %p93
      %p95 = scmp.ne.s32.totalorder %s84, %s87
      %p96 = scmp.eq.s32.totalorder %s46, 11
      %p97 = por %p95, %p96
      %p98 = scmp.ne.s32.totalorder %s87, %s88
      %p99 = scmp.eq.s32.totalorder %s46, 0
      %p100 = por %p98, %p99
      %p101 = scmp.ne.s32.totalorder %s87, %s88
      %p102 = scmp.eq.s32.totalorder %s47, 11
      %p103 = por %p101, %p102
      %p105 = scmp.ne.s32.totalorder %s88, %s104
      %p106 = scmp.eq.s32.totalorder %s47, 0
      %p107 = por %p105, %p106
      %s108 = ssub.s32 %s48, %s60
      %s109 = ssub.s32 %s49, %s56
      %s110 = sor.u32 %s108, %s109
      %p111 = scmp.eq.s32.totalorder %s110, 0
      %s113 = sadd.s32 %s112, 1
      %s114 = scalar_select %p111, %s112, %s113
      %p117 = pneg %p111
      %p118 = scmp.eq.s32.totalorder %s41, 11
      %p119 = por %p117, %p118
      %p120 = scmp.ne.s32.totalorder %s112, %s115
      %p121 = scmp.eq.s32.totalorder %s41, 0
      %p122 = por %p120, %p121
      %p123 = scmp.ne.s32.totalorder %s112, %s115
      %p124 = scmp.eq.s32.totalorder %s46, 11
      %p125 = por %p123, %p124
      %p126 = scmp.ne.s32.totalorder %s115, %s116
      %p127 = scmp.eq.s32.totalorder %s46, 0
      %p128 = por %p126, %p127
      %p129 = scmp.ne.s32.totalorder %s115, %s116
      %p130 = scmp.eq.s32.totalorder %s47, 11
      %p131 = por %p129, %p130
      %p133 = scmp.ne.s32.totalorder %s116, %s132
      %p134 = scmp.eq.s32.totalorder %s47, 0
      %p135 = por %p133, %p134
      %s136 = ssub.s32 %s48, %s60
      %s137 = ssub.s32 %s49, %s56
      %s138 = sor.u32 %s136, %s137
      %p139 = scmp.eq.s32.totalorder %s138, 0
      %s141 = sadd.s32 %s140, 1
      %s142 = scalar_select %p139, %s140, %s141
      %p145 = pneg %p139
      %p146 = scmp.eq.s32.totalorder %s41, 11
      %p147 = por %p145, %p146
      %p148 = scmp.ne.s32.totalorder %s140, %s143
      %p149 = scmp.eq.s32.totalorder %s41, 0
      %p150 = por %p148, %p149
      %p151 = scmp.ne.s32.totalorder %s140, %s143
      %p152 = scmp.eq.s32.totalorder %s46, 11
      %p153 = por %p151, %p152
      %p154 = scmp.ne.s32.totalorder %s143, %s144
      %p155 = scmp.eq.s32.totalorder %s46, 0
      %p156 = por %p154, %p155
      %p157 = scmp.ne.s32.totalorder %s143, %s144
      %p158 = scmp.eq.s32.totalorder %s47, 11
      %p159 = por %p157, %p158
      %p161 = scmp.ne.s32.totalorder %s144, %s160
      %p162 = scmp.eq.s32.totalorder %s47, 0
      %p163 = por %p161, %p162
      %s165 = sadd.s32 %s164, 1
      %p168 = scmp.eq.s32.totalorder %s41, 11
      %p169 = scmp.ne.s32.totalorder %s164, %s166
      %p170 = scmp.eq.s32.totalorder %s41, 0
      %p171 = por %p169, %p170
      %p172 = scmp.ne.s32.totalorder %s164, %s166
      %p173 = scmp.eq.s32.totalorder %s46, 11
      %p174 = por %p172, %p173
      %p175 = scmp.ne.s32.totalorder %s166, %s167
      %p176 = scmp.eq.s32.totalorder %s46, 0
      %p177 = por %p175, %p176
      %p178 = scmp.ne.s32.totalorder %s166, %s167
      %p179 = scmp.eq.s32.totalorder %s47, 11
      %p180 = por %p178, %p179
      %p182 = scmp.ne.s32.totalorder %s167, %s181
      %p183 = scmp.eq.s32.totalorder %s47, 0
      %p184 = por %p182, %p183
      %s186 = sadd.s32 %s185, 1
      %p189 = scmp.eq.s32.totalorder %s41, 11
      %p190 = scmp.ne.s32.totalorder %s185, %s187
      %p191 = scmp.eq.s32.totalorder %s41, 0
      %p192 = por %p190, %p191
      %p193 = scmp.ne.s32.totalorder %s185, %s187
      %p194 = scmp.eq.s32.totalorder %s46, 11
      %p195 = por %p193, %p194
      %p196 = scmp.ne.s32.totalorder %s187, %s188
      %p197 = scmp.eq.s32.totalorder %s46, 0
      %p198 = por %p196, %p197
      %p199 = scmp.ne.s32.totalorder %s187, %s188
      %p200 = scmp.eq.s32.totalorder %s47, 11
      %p201 = por %p199, %p200
      %p203 = scmp.ne.s32.totalorder %s188, %s202
      %p204 = scmp.eq.s32.totalorder %s47, 0
      %p205 = por %p203, %p204
      %s207 = sadd.s32 %s206, 1
      %p210 = scmp.eq.s32.totalorder %s41, 11
      %p211 = scmp.ne.s32.totalorder %s206, %s208
      %p212 = scmp.eq.s32.totalorder %s41, 0
      %p213 = por %p211, %p212
      %p214 = scmp.ne.s32.totalorder %s206, %s208
      %p215 = scmp.eq.s32.totalorder %s46, 11
      %p216 = por %p214, %p215
      %p217 = scmp.ne.s32.totalorder %s208, %s209
      %p218 = scmp.eq.s32.totalorder %s46, 0
      %p219 = por %p217, %p218
      %p220 = scmp.ne.s32.totalorder %s208, %s209
      %p221 = scmp.eq.s32.totalorder %s47, 11
      %p222 = por %p220, %p221
      %p224 = scmp.ne.s32.totalorder %s209, %s223
      %p225 = scmp.eq.s32.totalorder %s47, 0
      %p226 = por %p224, %p225
      %p227 = scmp.le.s32.totalorder 1, %s41
      %p228 = scmp.lt.s32.totalorder %s41, 13
      %p229 = pnand %p227, %p228
      %p230 = pneg %p229
      // Predicated region
      $region9: #{forward.1} parent=5 // pred_check
        _
      $region10: #{forward.1} parent=5 // pred_check_branch
        %232 = sbr.rel (%p229) target = $region12
      $region11: #{forward.1} parent=5 // pred_region
        %s233 = ssub.s32 %s41, 1
        // Predicated region
        $region13: #{forward.1} parent=11 // pred_check
          %p234 = pneg %p74
        $region14: #{forward.1} parent=11 // pred_check_branch
          %236 = sbr.rel (%p234) target = $region16
        $region15: #{forward.1} parent=11 // pred_region
          %s238 = ssub.s32 2048, 2048
          %239 = vsyncadd [#allocation9], %s238
          %s240 = sshll.u32 [#allocation8], 4
          %s241 = int_to_ptr.vmem [resolvable:$true] %s240
          %246 = dma.hbm_to_vmem [thread:$0]  %s4, 2048, %s241, [#allocation9], 128, 128, 8
        $region16: #{forward.1} parent=11 // pred_fallthru
          _
        // Predicated region
        $region17: #{forward.1} parent=11 // pred_check
          %p247 = pneg %p177
        $region18: #{forward.1} parent=11 // pred_check_branch
          %249 = sbr.rel (%p247) target = $region20
        $region19: #{forward.1} parent=11 // pred_region
          %s251 = ssub.s32 1024, 1024
          %252 = vsyncadd [#allocation14], %s251
          %s253 = sshll.u32 [#allocation15], 4
          %s254 = int_to_ptr.vmem [resolvable:$true] %s253
          %259 = dma.hbm_to_vmem [thread:$0]  %s8, 1024, %s254, [#allocation14], 64, 64, 4
        $region20: #{forward.1} parent=11 // pred_fallthru
          _
        // Predicated region
        $region21: #{forward.1} parent=11 // pred_check
          %p260 = pneg %p198
        $region22: #{forward.1} parent=11 // pred_check_branch
          %262 = sbr.rel (%p260) target = $region24
        $region23: #{forward.1} parent=11 // pred_region
          _
        $region24: #{forward.1} parent=11 // pred_fallthru
          _
      $region12: #{forward.1} parent=5 // pred_fallthru
        _
      %p263 = scmp.lt.s32.totalorder %s41, 12
      // Predicated region
      $region25: #{forward.1} parent=5 // pred_check
        %p264 = pneg %p263
      $region26: #{forward.1} parent=5 // pred_check_branch
        %266 = sbr.rel (%p264) target = $region28
      $region27: #{forward.1} parent=5 // pred_region
        // Predicated region
        $region29: #{forward.1} parent=27 // pred_check
          %p267 = pneg %p94
        $region30: #{forward.1} parent=27 // pred_check_branch
          %269 = sbr.rel (%p267) target = $region32
        $region31: #{forward.1} parent=27 // pred_region
          %s270 = sand.u32 %s41, 1
          %s271 = scalar_lea.sflag [#allocation11], %s270
          %s272 = sand.u32 %s84, 1
          %s273 = smul.addr %s272, 16
          %s274 = scalar_lea.vmem [#allocation10], %s273
          %s276 = ssub.s32 256, 256
          %277 = vsyncadd %s271, %s276
          %s278 = smul.addr %s49, 4
          %s279 = smul.addr %s278, 64
          %s280 = scalar_lea.hbm %s5, %s279
          %s281 = sshll.u32 %s274, 4
          %s282 = int_to_ptr.vmem [resolvable:$true] %s281
          %287 = dma.hbm_to_vmem [thread:$0]  %s280, 256, %s282, %s271, 64, 64, 4
        $region32: #{forward.1} parent=27 // pred_fallthru
          _
        // Predicated region
        $region33: #{forward.1} parent=27 // pred_check
          %p288 = pneg %p122
        $region34: #{forward.1} parent=27 // pred_check_branch
          %290 = sbr.rel (%p288) target = $region36
        $region35: #{forward.1} parent=27 // pred_region
          %s291 = sand.u32 %s41, 1
          %s292 = scalar_lea.sflag [#allocation11], %s291
          %s293 = sand.u32 %s112, 1
          %s294 = smul.addr %s293, 128
          %s295 = scalar_lea.vmem [#allocation12], %s294
          %s297 = ssub.s32 2048, 2048
          %298 = vsyncadd %s292, %s297
          %s299 = smul.addr %s49, 32
          %s300 = smul.addr %s48, 192
          %s301 = sadd.s32 %s299, %s300
          %s302 = smul.addr %s301, 64
          %s303 = scalar_lea.hbm %s6, %s302
          %s304 = sshll.u32 %s295, 4
          %s305 = int_to_ptr.vmem [resolvable:$true] %s304
          %310 = dma.hbm_to_vmem [thread:$0]  %s303, 2048, %s305, %s292, 64, 64, 4
        $region36: #{forward.1} parent=27 // pred_fallthru
          _
        // Predicated region
        $region37: #{forward.1} parent=27 // pred_check
          %p311 = pneg %p150
        $region38: #{forward.1} parent=27 // pred_check_branch
          %313 = sbr.rel (%p311) target = $region40
        $region39: #{forward.1} parent=27 // pred_region
          %s314 = sand.u32 %s41, 1
          %s315 = scalar_lea.sflag [#allocation14], %s314
          %s316 = sand.u32 %s140, 1
          %s317 = scalar_lea.vmem [#allocation13], %s316
          %s319 = ssub.s32 16, 16
          %320 = vsyncadd %s315, %s319
          %s321 = smul.addr %s48, 6
          %s322 = sadd.s32 %s49, %s321
          %s323 = smul.addr %s322, 16
          %s324 = scalar_lea.hbm %s7, %s323
          %s326 = sshll.u32 %s317, 4
          %s327 = int_to_ptr.vmem [resolvable:$true] %s326
          %329 = dma.hbm_to_vmem [thread:$0]  %s324, 16, %s327, %s315
        $region40: #{forward.1} parent=27 // pred_fallthru
          _
      $region28: #{forward.1} parent=5 // pred_fallthru
        _
      %p330 = scmp.le.s32.totalorder 1, %s41
      %p331 = scmp.lt.s32.totalorder %s41, 13
      %p332 = pnand %p330, %p331
      %p333 = pneg %p332
      // Predicated region
      $region41: #{forward.1} parent=5 // pred_check
        _
      $region42: #{forward.1} parent=5 // pred_check_branch
        %335 = sbr.rel (%p332) target = $region44
      $region43: #{forward.1} parent=5 // pred_region
        %s336 = ssub.s32 %s41, 1
        // Predicated region
        $region45: #{forward.1} parent=43 // pred_check
          %p337 = pneg %p74
        $region46: #{forward.1} parent=43 // pred_check_branch
          %339 = sbr.rel (%p337) target = $region48
        $region47: #{forward.1} parent=43 // pred_region
          %340 = dma.done [#allocation9], 2048
        $region48: #{forward.1} parent=43 // pred_fallthru
          _
        %s341 = sand.u32 %s46, 1
        %s342 = scalar_lea.sflag [#allocation11], %s341
        %s343 = sand.u32 %s87, 1
        %s344 = smul.addr %s343, 16
        %s345 = scalar_lea.vmem [#allocation10], %s344
        // Predicated region
        $region49: #{forward.1} parent=43 // pred_check
          %p346 = pneg %p100
        $region50: #{forward.1} parent=43 // pred_check_branch
          %348 = sbr.rel (%p346) target = $region52
        $region51: #{forward.1} parent=43 // pred_region
          %349 = dma.done %s342, 256
        $region52: #{forward.1} parent=43 // pred_fallthru
          _
        %s350 = sand.u32 %s46, 1
        %s351 = scalar_lea.sflag [#allocation11], %s350
        %s352 = sand.u32 %s115, 1
        %s353 = smul.addr %s352, 128
        %s354 = scalar_lea.vmem [#allocation12], %s353
        // Predicated region
        $region53: #{forward.1} parent=43 // pred_check
          %p355 = pneg %p128
        $region54: #{forward.1} parent=43 // pred_check_branch
          %357 = sbr.rel (%p355) target = $region56
        $region55: #{forward.1} parent=43 // pred_region
          %358 = dma.done %s351, 2048
        $region56: #{forward.1} parent=43 // pred_fallthru
          _
        %s359 = sand.u32 %s46, 1
        %s360 = scalar_lea.sflag [#allocation14], %s359
        %s361 = sand.u32 %s143, 1
        %s362 = scalar_lea.vmem [#allocation13], %s361
        // Predicated region
        $region57: #{forward.1} parent=43 // pred_check
          %p363 = pneg %p156
        $region58: #{forward.1} parent=43 // pred_check_branch
          %365 = sbr.rel (%p363) target = $region60
        $region59: #{forward.1} parent=43 // pred_region
          %366 = dma.done %s360, 16
        $region60: #{forward.1} parent=43 // pred_fallthru
          _
        // Predicated region
        $region61: #{forward.1} parent=43 // pred_check
          %p367 = pneg %p177
        $region62: #{forward.1} parent=43 // pred_check_branch
          %369 = sbr.rel (%p367) target = $region64
        $region63: #{forward.1} parent=43 // pred_region
          %370 = dma.done [#allocation14], 1024
        $region64: #{forward.1} parent=43 // pred_fallthru
          _
        %p371 = pneg %p74
        %p372 = pneg %p71
        %s373 = sand.u32 %s46, 1
        %s374 = scalar_lea.sflag [#allocation11], %s373
        %s375 = sand.u32 %s87, 1
        %s376 = smul.addr %s375, 16
        %s377 = scalar_lea.vmem [#allocation10], %s376
        %p378 = pneg %p100
        %p379 = pneg %p97
        %s380 = sand.u32 %s46, 1
        %s381 = scalar_lea.sflag [#allocation11], %s380
        %s382 = sand.u32 %s115, 1
        %s383 = smul.addr %s382, 128
        %s384 = scalar_lea.vmem [#allocation12], %s383
        %p385 = pneg %p128
        %p386 = pneg %p125
        %s387 = sand.u32 %s46, 1
        %s388 = scalar_lea.sflag [#allocation14], %s387
        %s389 = sand.u32 %s143, 1
        %s390 = scalar_lea.vmem [#allocation13], %s389
        %p391 = pneg %p156
        %p392 = pneg %p153
        %p393 = pneg %p177
        %p394 = pneg %p174
        %p395 = pneg %p198
        %p396 = pneg %p195
        %p397 = pneg %p219
        %p398 = pneg %p216
        %p400 = scmp.lt.s32.totalorder %s50, 0
        %s401 = ssub.s32 0, %s50
        %s402 = scalar_select %p400, %s401, %s50
        %s403 = sand.u32 %s402, 1
        %s404 = ssub.s32 0, %s403
        %s405 = scalar_select %p400, %s404, %s403
        %p406 = scmp.ne.s32.totalorder %s405, 0
        %p407 = scmp.lt.s32.totalorder %s405, 0
        %p408 = pnand %p407, %p406
        %p409 = pneg %p408
        %s410 = sadd.s32 %s405, 2
        %s411 = scalar_select %p409, %s410, %s405
        %s412 = ssub.s32 1, %s411
        %p413 = scmp.eq.s32.totalorder %s50, 0
        %p414 = scmp.eq.s32.totalorder %s51, 0
        %p415 = pnand %p413, %p414
        %p416 = pneg %p415
        // Predicated region
        $region65: #{forward.1} parent=43 // pred_check
          _
        $region66: #{forward.1} parent=43 // pred_check_branch
          %418 = sbr.rel (%p415) target = $region68
        $region67: #{forward.1} parent=43 // pred_region
          %v419 = vld [vmem:[#allocation8] sm:$0xff]
          %v420 = vld [vmem:[#allocation8 + $0x8] sm:$0xff]
          %v421 = vld [vmem:[#allocation8 + $0x10] sm:$0xff]
          %v422 = vld [vmem:[#allocation8 + $0x18] sm:$0xff]
          %v423 = vld [vmem:[#allocation8 + $0x20] sm:$0xff]
          %v424 = vld [vmem:[#allocation8 + $0x28] sm:$0xff]
          %v425 = vld [vmem:[#allocation8 + $0x30] sm:$0xff]
          %v426 = vld [vmem:[#allocation8 + $0x38] sm:$0xff]
          %v427 = vld [vmem:[#allocation8 + $0x40] sm:$0xff]
          %v428 = vld [vmem:[#allocation8 + $0x48] sm:$0xff]
          %v429 = vld [vmem:[#allocation8 + $0x50] sm:$0xff]
          %v430 = vld [vmem:[#allocation8 + $0x58] sm:$0xff]
          %v431 = vld [vmem:[#allocation8 + $0x60] sm:$0xff]
          %v432 = vld [vmem:[#allocation8 + $0x68] sm:$0xff]
          %v433 = vld [vmem:[#allocation8 + $0x70] sm:$0xff]
          %v434 = vld [vmem:[#allocation8 + $0x78] sm:$0xff]
          %435 = vst [vmem:[#allocation2] sm:$0xff] %v419
          %436 = vst [vmem:[#allocation2 + $0x8] sm:$0xff] %v420
          %437 = vst [vmem:[#allocation2 + $0x10] sm:$0xff] %v421
          %438 = vst [vmem:[#allocation2 + $0x18] sm:$0xff] %v422
          %439 = vst [vmem:[#allocation2 + $0x20] sm:$0xff] %v423
          %440 = vst [vmem:[#allocation2 + $0x28] sm:$0xff] %v424
          %441 = vst [vmem:[#allocation2 + $0x30] sm:$0xff] %v425
          %442 = vst [vmem:[#allocation2 + $0x38] sm:$0xff] %v426
          %443 = vst [vmem:[#allocation2 + $0x40] sm:$0xff] %v427
          %444 = vst [vmem:[#allocation2 + $0x48] sm:$0xff] %v428
          %445 = vst [vmem:[#allocation2 + $0x50] sm:$0xff] %v429
          %446 = vst [vmem:[#allocation2 + $0x58] sm:$0xff] %v430
          %447 = vst [vmem:[#allocation2 + $0x60] sm:$0xff] %v431
          %448 = vst [vmem:[#allocation2 + $0x68] sm:$0xff] %v432
          %449 = vst [vmem:[#allocation2 + $0x70] sm:$0xff] %v433
          %450 = vst [vmem:[#allocation2 + $0x78] sm:$0xff] %v434
        $region68: #{forward.1} parent=43 // pred_fallthru
          _
        %s451 = sld [smem:[#allocation4 + %s51]]
        %s452 = sld [smem:[#allocation5 + %s51]]
        %s453 = smul.u32 %s411, 4
        %s454 = sadd.s32 %s453, %s451
        %s455 = smul.u32 %s454, 32
        %s456 = scalar_lea.vmem [#allocation2], %s455
        %v457 = vld [vmem:[%s456] sm:$0xff]
        %v458 = vld [vmem:[%s456 + $0x8] sm:$0xff]
        %v459 = vld [vmem:[%s456 + $0x10] sm:$0xff]
        %v460 = vld [vmem:[%s456 + $0x18] sm:$0xff]
        %v461 = vpack.c.bf16 %v458, %v457
        %v462 = vpack.c.bf16 %v460, %v459
        %s463 = sadd.s32 %s453, %s452
        %s464 = smul.u32 %s463, 32
        %s465 = scalar_lea.vmem [#allocation2], %s464
        %v466 = vld [vmem:[%s465] sm:$0xff]
        %v467 = vld [vmem:[%s465 + $0x8] sm:$0xff]
        %v468 = vld [vmem:[%s465 + $0x10] sm:$0xff]
        %v469 = vld [vmem:[%s465 + $0x18] sm:$0xff]
        %v470 = vpack.c.bf16 %v467, %v466
        %v471 = vpack.c.bf16 %v469, %v468
        %v472 = vld [vmem:[%s345] sm:$0xf]
        %v473 = vld [vmem:[%s345 + $0x4] sm:$0xf]
        %v474 = vld [vmem:[%s345 + $0x8] sm:$0xf]
        %v475 = vld [vmem:[%s345 + $0xc] sm:$0xf]
        %v480 = vunpack.c.l.b16 %v472
        %v481 = vunpack.c.l.b16 %v473
        %v482 = vunpack.c.l.b16 %v474
        %v483 = vunpack.c.l.b16 %v475
        %v484 = vpack.c.b16 %v481, %v480
        %v485 = vpack.c.b16 %v483, %v482
        %vm486 = vcmask 261120
        %v488 = vsel %vm486, %v484, 0
        %v491 = vsel %vm486, %v485, 0
        %493 = vmatprep.subr.bf16.mxu0 0
        %494 = vmatpush1.bf16.msra.mxu0 0
        %495 = vmatprep.subr.bf16.mxu0 0
        %496 = vmatpush1.bf16.msra.mxu0 0
        %497 = vmatprep.subr.bf16.mxu0 0
        %498 = vmatpush1.bf16.msra.mxu0 0
        %499 = vmatprep.subr.bf16.mxu0 0
        %500 = vmatpush1.bf16.msra.mxu0 0
        %501 = vmatprep.subr.bf16.mxu0 0
        %502 = vmatpush1.bf16.msra.mxu0 0
        %503 = vmatprep.subr.bf16.mxu0 0
        %504 = vmatpush1.bf16.msra.mxu0 0
        %505 = vmatprep.subr.bf16.mxu0 0
        %506 = vmatpush1.bf16.msra.mxu0 %v462
        %507 = vmatprep.subr.bf16.mxu0 0
        %508 = vmatpush1.bf16.msra.mxu0 %v461
        %509 = vmatprep.subr.bf16.mxu0 0
        %510 = vmatpush2.bf16.msra.mxu0 0
        %511 = vmatprep.subr.bf16.mxu0 0
        %512 = vmatpush2.bf16.msra.mxu0 0
        %513 = vmatprep.subr.bf16.mxu0 0
        %514 = vmatpush2.bf16.msra.mxu0 0
        %515 = vmatprep.subr.bf16.mxu0 0
        %516 = vmatpush2.bf16.msra.mxu0 0
        %517 = vmatprep.subr.bf16.mxu0 0
        %518 = vmatpush2.bf16.msra.mxu0 0
        %519 = vmatprep.subr.bf16.mxu0 0
        %520 = vmatpush2.bf16.msra.mxu0 0
        %521 = vmatprep.subr.bf16.mxu0 0
        %522 = vmatpush2.bf16.msra.mxu0 0
        %523 = vmatprep.subr.bf16.mxu0 0
        %524 = vmatpush2.bf16.msra.mxu0 0
        %525 = vmatprep.mubr.bf16.mxu0 0
        %526 = vmatmul.mubr.bf16.gmra.mxu0 %v488
        %v527 = vpop.f32.mrf.mxu0
        %v528 = vadd.f32 0.0, %v527
        %v529 = vpop.f32.mrf.mxu0
        %v530 = vpop.f32.mrf.mxu0
        %v531 = vadd.f32 0.0, %v530
        %v532 = vpop.f32.mrf.mxu0
        %533 = vmatprep.mubr.bf16.mxu0 0
        %534 = vmatmul.mubr.bf16.gmra.mxu0 %v491
        %v535 = vpop.f32.mrf.mxu0
        %v536 = vadd.f32 0.0, %v535
        %v537 = vpop.f32.mrf.mxu0
        %v538 = vpop.f32.mrf.mxu0
        %v539 = vadd.f32 0.0, %v538
        %v540 = vpop.f32.mrf.mxu0
        %541 = vdwg.mxu0
        %v542 = vpack.c.bf16 %v531, %v528
        %v543 = vpack.c.bf16 %v539, %v536
        %v544 = vld [vmem:[%s354] sm:$0xf]
        %v545 = vld [vmem:[%s354 + $0x4] sm:$0xf]
        %v546 = vld [vmem:[%s354 + $0x8] sm:$0xf]
        %v547 = vld [vmem:[%s354 + $0xc] sm:$0xf]
        %v548 = vld [vmem:[%s354 + $0x10] sm:$0xf]
        %v549 = vld [vmem:[%s354 + $0x14] sm:$0xf]
        %v550 = vld [vmem:[%s354 + $0x18] sm:$0xf]
        %v551 = vld [vmem:[%s354 + $0x1c] sm:$0xf]
        %v552 = vld [vmem:[%s354 + $0x20] sm:$0xf]
        %v553 = vld [vmem:[%s354 + $0x24] sm:$0xf]
        %v554 = vld [vmem:[%s354 + $0x28] sm:$0xf]
        %v555 = vld [vmem:[%s354 + $0x2c] sm:$0xf]
        %v556 = vld [vmem:[%s354 + $0x30] sm:$0xf]
        %v557 = vld [vmem:[%s354 + $0x34] sm:$0xf]
        %v558 = vld [vmem:[%s354 + $0x38] sm:$0xf]
        %v559 = vld [vmem:[%s354 + $0x3c] sm:$0xf]
        %v560 = vld [vmem:[%s354 + $0x40] sm:$0xf]
        %v561 = vld [vmem:[%s354 + $0x44] sm:$0xf]
        %v562 = vld [vmem:[%s354 + $0x48] sm:$0xf]
        %v563 = vld [vmem:[%s354 + $0x4c] sm:$0xf]
        %v564 = vld [vmem:[%s354 + $0x50] sm:$0xf]
        %v565 = vld [vmem:[%s354 + $0x54] sm:$0xf]
        %v566 = vld [vmem:[%s354 + $0x58] sm:$0xf]
        %v567 = vld [vmem:[%s354 + $0x5c] sm:$0xf]
        %v568 = vld [vmem:[%s354 + $0x60] sm:$0xf]
        %v569 = vld [vmem:[%s354 + $0x64] sm:$0xf]
        %v570 = vld [vmem:[%s354 + $0x68] sm:$0xf]
        %v571 = vld [vmem:[%s354 + $0x6c] sm:$0xf]
        %v572 = vld [vmem:[%s354 + $0x70] sm:$0xf]
        %v573 = vld [vmem:[%s354 + $0x74] sm:$0xf]
        %v574 = vld [vmem:[%s354 + $0x78] sm:$0xf]
        %v575 = vld [vmem:[%s354 + $0x7c] sm:$0xf]
        %v576 = vld [vmem:[%s362] sm:$0x1]
        %v578 = vlaneseq
        %v579 = vshrl.u32 %v578, 7
        %v580 = vsub.s32 0, %v579
        %v581 = vrot.slane %v576, %v580
        %v615 = vunpack.c.l.b16 %v544
        %v616 = vunpack.c.l.b16 %v545
        %v617 = vunpack.c.l.b16 %v546
        %v618 = vunpack.c.l.b16 %v547
        %v619 = vunpack.c.l.b16 %v548
        %v620 = vunpack.c.l.b16 %v549
        %v621 = vunpack.c.l.b16 %v550
        %v622 = vunpack.c.l.b16 %v551
        %v623 = vunpack.c.l.b16 %v552
        %v624 = vunpack.c.l.b16 %v553
        %v625 = vunpack.c.l.b16 %v554
        %v626 = vunpack.c.l.b16 %v555
        %v627 = vunpack.c.l.b16 %v556
        %v628 = vunpack.c.l.b16 %v557
        %v629 = vunpack.c.l.b16 %v558
        %v630 = vunpack.c.l.b16 %v559
        %v631 = vunpack.c.l.b16 %v560
        %v632 = vunpack.c.l.b16 %v561
        %v633 = vunpack.c.l.b16 %v562
        %v634 = vunpack.c.l.b16 %v563
        %v635 = vunpack.c.l.b16 %v564
        %v636 = vunpack.c.l.b16 %v565
        %v637 = vunpack.c.l.b16 %v566
        %v638 = vunpack.c.l.b16 %v567
        %v639 = vunpack.c.l.b16 %v568
        %v640 = vunpack.c.l.b16 %v569
        %v641 = vunpack.c.l.b16 %v570
        %v642 = vunpack.c.l.b16 %v571
        %v643 = vunpack.c.l.b16 %v572
        %v644 = vunpack.c.l.b16 %v573
        %v645 = vunpack.c.l.b16 %v574
        %v646 = vunpack.c.l.b16 %v575
        %v647 = vpack.c.b16 %v616, %v615
        %v648 = vpack.c.b16 %v618, %v617
        %v649 = vpack.c.b16 %v620, %v619
        %v650 = vpack.c.b16 %v622, %v621
        %v651 = vpack.c.b16 %v624, %v623
        %v652 = vpack.c.b16 %v626, %v625
        %v653 = vpack.c.b16 %v628, %v627
        %v654 = vpack.c.b16 %v630, %v629
        %v655 = vpack.c.b16 %v632, %v631
        %v656 = vpack.c.b16 %v634, %v633
        %v657 = vpack.c.b16 %v636, %v635
        %v658 = vpack.c.b16 %v638, %v637
        %v659 = vpack.c.b16 %v640, %v639
        %v660 = vpack.c.b16 %v642, %v641
        %v661 = vpack.c.b16 %v644, %v643
        %v662 = vpack.c.b16 %v646, %v645
        %679 = vmatprep.subr.bf16.mxu0 0
        %680 = vmatpush1.bf16.msra.mxu0 %v654
        %681 = vmatprep.subr.bf16.mxu0 0
        %682 = vmatpush1.bf16.msra.mxu0 %v653
        %683 = vmatprep.subr.bf16.mxu0 0
        %684 = vmatpush1.bf16.msra.mxu0 %v652
        %685 = vmatprep.subr.bf16.mxu0 0
        %686 = vmatpush1.bf16.msra.mxu0 %v651
        %687 = vmatprep.subr.bf16.mxu0 0
        %688 = vmatpush1.bf16.msra.mxu0 %v650
        %689 = vmatprep.subr.bf16.mxu0 0
        %690 = vmatpush1.bf16.msra.mxu0 %v649
        %691 = vmatprep.subr.bf16.mxu0 0
        %692 = vmatpush1.bf16.msra.mxu0 %v648
        %693 = vmatprep.subr.bf16.mxu0 0
        %694 = vmatpush1.bf16.msra.mxu0 %v647
        %695 = vmatprep.subr.bf16.mxu0 0
        %696 = vmatpush2.bf16.msra.mxu0 %v662
        %697 = vmatprep.subr.bf16.mxu0 0
        %698 = vmatpush2.bf16.msra.mxu0 %v661
        %699 = vmatprep.subr.bf16.mxu0 0
        %700 = vmatpush2.bf16.msra.mxu0 %v660
        %701 = vmatprep.subr.bf16.mxu0 0
        %702 = vmatpush2.bf16.msra.mxu0 %v659
        %703 = vmatprep.subr.bf16.mxu0 0
        %704 = vmatpush2.bf16.msra.mxu0 %v658
        %705 = vmatprep.subr.bf16.mxu0 0
        %706 = vmatpush2.bf16.msra.mxu0 %v657
        %707 = vmatprep.subr.bf16.mxu0 0
        %708 = vmatpush2.bf16.msra.mxu0 %v656
        %709 = vmatprep.subr.bf16.mxu0 0
        %710 = vmatpush2.bf16.msra.mxu0 %v655
        %711 = vmatprep.mubr.bf16.mxu0 %v470
        %712 = vmatmul.mubr.bf16.gmra.mxu0 %v542
        %v713 = vpop.f32.mrf.mxu0
        %v714 = vadd.f32 %v581, %v713
        %v715 = vpop.f32.mrf.mxu0
        %v716 = vpop.f32.mrf.mxu0
        %v717 = vadd.f32 %v581, %v716
        %v718 = vpop.f32.mrf.mxu0
        %719 = vmatprep.mubr.bf16.mxu0 %v471
        %720 = vmatmul.mubr.bf16.gmra.mxu0 %v543
        %v721 = vpop.f32.mrf.mxu0
        %v722 = vadd.f32 %v581, %v721
        %v723 = vpop.f32.mrf.mxu0
        %v724 = vpop.f32.mrf.mxu0
        %v725 = vadd.f32 %v581, %v724
        %v726 = vpop.f32.mrf.mxu0
        %727 = vdwg.mxu0
        %s728 = smul.u32 %s412, 4
        %s729 = sadd.s32 %s728, %s452
        %s730 = sld [smem:[#allocation6 + %s51]]
        %p731 = scmp.eq.s32.totalorder %s730, 1
        // Predicated region
        $region69: #{forward.1} parent=43 // pred_check
          %p732 = pneg %p731
        $region70: #{forward.1} parent=43 // pred_check_branch
          %734 = sbr.rel (%p732) target = $region72
        $region71: #{forward.1} parent=43 // pred_region
          %s735 = smul.u32 %s729, 32
          %s736 = scalar_lea.vmem [#allocation2], %s735
          %737 = vst [vmem:[%s736] sm:$0xff] %v714
          %738 = vst [vmem:[%s736 + $0x8] sm:$0xff] %v717
          %739 = vst [vmem:[%s736 + $0x10] sm:$0xff] %v722
          %740 = vst [vmem:[%s736 + $0x18] sm:$0xff] %v725
        $region72: #{forward.1} parent=43 // pred_fallthru
          _
        %s741 = sld [smem:[#allocation6 + %s51]]
        %p742 = scmp.eq.s32.totalorder %s741, 0
        // Predicated region
        $region73: #{forward.1} parent=43 // pred_check
          %p743 = pneg %p742
        $region74: #{forward.1} parent=43 // pred_check_branch
          %745 = sbr.rel (%p743) target = $region76
        $region75: #{forward.1} parent=43 // pred_region
          %s746 = smul.u32 %s729, 32
          %s747 = scalar_lea.vmem [#allocation2], %s746
          %v748 = vld [vmem:[%s747] sm:$0xff]
          %v749 = vld [vmem:[%s747 + $0x8] sm:$0xff]
          %v750 = vld [vmem:[%s747 + $0x10] sm:$0xff]
          %v751 = vld [vmem:[%s747 + $0x18] sm:$0xff]
          %v752 = vadd.f32 %v748, %v714
          %v753 = vadd.f32 %v749, %v717
          %v754 = vadd.f32 %v750, %v722
          %v755 = vadd.f32 %v751, %v725
          %756 = vst [vmem:[%s747] sm:$0xff] %v752
          %757 = vst [vmem:[%s747 + $0x8] sm:$0xff] %v753
          %758 = vst [vmem:[%s747 + $0x10] sm:$0xff] %v754
          %759 = vst [vmem:[%s747 + $0x18] sm:$0xff] %v755
        $region76: #{forward.1} parent=43 // pred_fallthru
          _
        %s760 = sld [smem:[#allocation7 + %s51]]
        %p761 = scmp.eq.s32.totalorder %s760, 1
        // Predicated region
        $region77: #{forward.1} parent=43 // pred_check
          %p762 = pneg %p761
        $region78: #{forward.1} parent=43 // pred_check_branch
          %764 = sbr.rel (%p762) target = $region80
        $region79: #{forward.1} parent=43 // pred_region
          %s765 = smul.u32 %s729, 32
          %s766 = scalar_lea.vmem [#allocation2], %s765
          %v767 = vld [vmem:[%s766] sm:$0xff]
          %v768 = vld [vmem:[%s766 + $0x8] sm:$0xff]
          %v769 = vld [vmem:[%s766 + $0x10] sm:$0xff]
          %v770 = vld [vmem:[%s766 + $0x18] sm:$0xff]
          %vm771 = vcmp.ge.f32.partialorder %v767, 0.0
          %vm772 = vcmp.ge.f32.partialorder %v768, 0.0
          %vm773 = vcmp.ge.f32.partialorder %v769, 0.0
          %vm774 = vcmp.ge.f32.partialorder %v770, 0.0
          %v775 = vmul.f32 %v767, 0.01
          %v776 = vmul.f32 %v768, 0.01
          %v777 = vmul.f32 %v769, 0.01
          %v778 = vmul.f32 %v770, 0.01
          %v779 = vsel %vm771, %v767, %v775
          %v780 = vsel %vm772, %v768, %v776
          %v781 = vsel %vm773, %v769, %v777
          %v782 = vsel %vm774, %v770, %v778
          %783 = vst [vmem:[%s766] sm:$0xff] %v779
          %784 = vst [vmem:[%s766 + $0x8] sm:$0xff] %v780
          %785 = vst [vmem:[%s766 + $0x10] sm:$0xff] %v781
          %786 = vst [vmem:[%s766 + $0x18] sm:$0xff] %v782
        $region80: #{forward.1} parent=43 // pred_fallthru
          _
        %p787 = scmp.eq.s32.totalorder %s50, 1
        %p788 = scmp.eq.s32.totalorder %s51, 5
        %p789 = pnand %p787, %p788
        %p790 = pneg %p789
        // Predicated region
        $region81: #{forward.1} parent=43 // pred_check
          _
        $region82: #{forward.1} parent=43 // pred_check_branch
          %792 = sbr.rel (%p789) target = $region84
        $region83: #{forward.1} parent=43 // pred_region
          %s793 = smul.u32 %s728, 32
          %s794 = scalar_lea.vmem [#allocation2], %s793
          %v795 = vld [vmem:[%s794] sm:$0xff]
          %v796 = vld [vmem:[%s794 + $0x8] sm:$0xff]
          %v797 = vld [vmem:[%s794 + $0x10] sm:$0xff]
          %v798 = vld [vmem:[%s794 + $0x18] sm:$0xff]
          %v799 = vpack.c.bf16 %v796, %v795
          %v800 = vpack.c.bf16 %v798, %v797
          %v801 = vld [vmem:[#allocation15] sm:$0xf]
          %v802 = vld [vmem:[#allocation15 + $0x4] sm:$0xf]
          %v803 = vld [vmem:[#allocation15 + $0x8] sm:$0xf]
          %v804 = vld [vmem:[#allocation15 + $0xc] sm:$0xf]
          %v805 = vld [vmem:[#allocation15 + $0x10] sm:$0xf]
          %v806 = vld [vmem:[#allocation15 + $0x14] sm:$0xf]
          %v807 = vld [vmem:[#allocation15 + $0x18] sm:$0xf]
          %v808 = vld [vmem:[#allocation15 + $0x1c] sm:$0xf]
          %v809 = vld [vmem:[#allocation15 + $0x20] sm:$0xf]
          %v810 = vld [vmem:[#allocation15 + $0x24] sm:$0xf]
          %v811 = vld [vmem:[#allocation15 + $0x28] sm:$0xf]
          %v812 = vld [vmem:[#allocation15 + $0x2c] sm:$0xf]
          %v813 = vld [vmem:[#allocation15 + $0x30] sm:$0xf]
          %v814 = vld [vmem:[#allocation15 + $0x34] sm:$0xf]
          %v815 = vld [vmem:[#allocation15 + $0x38] sm:$0xf]
          %v816 = vld [vmem:[#allocation15 + $0x3c] sm:$0xf]
          %v817 = vld [vmem:[%s9] sm:$0x1]
          %v819 = vlaneseq
          %v820 = vshrl.u32 %v819, 7
          %v821 = vsub.s32 0, %v820
          %v822 = vrot.slane %v817, %v821
          %v840 = vunpack.c.l.b16 %v801
          %v841 = vunpack.c.l.b16 %v802
          %v842 = vunpack.c.l.b16 %v803
          %v843 = vunpack.c.l.b16 %v804
          %v844 = vunpack.c.l.b16 %v805
          %v845 = vunpack.c.l.b16 %v806
          %v846 = vunpack.c.l.b16 %v807
          %v847 = vunpack.c.l.b16 %v808
          %v848 = vunpack.c.l.b16 %v809
          %v849 = vunpack.c.l.b16 %v810
          %v850 = vunpack.c.l.b16 %v811
          %v851 = vunpack.c.l.b16 %v812
          %v852 = vunpack.c.l.b16 %v813
          %v853 = vunpack.c.l.b16 %v814
          %v854 = vunpack.c.l.b16 %v815
          %v855 = vunpack.c.l.b16 %v816
          %v856 = vpack.c.b16 %v841, %v840
          %v857 = vpack.c.b16 %v843, %v842
          %v858 = vpack.c.b16 %v845, %v844
          %v859 = vpack.c.b16 %v847, %v846
          %v860 = vpack.c.b16 %v849, %v848
          %v861 = vpack.c.b16 %v851, %v850
          %v862 = vpack.c.b16 %v853, %v852
          %v863 = vpack.c.b16 %v855, %v854
          %872 = vmatprep.subr.bf16.mxu0 0
          %873 = vmatpush1.bf16.msra.mxu0 %v863
          %874 = vmatprep.subr.bf16.mxu0 0
          %875 = vmatpush1.bf16.msra.mxu0 %v862
          %876 = vmatprep.subr.bf16.mxu0 0
          %877 = vmatpush1.bf16.msra.mxu0 %v861
          %878 = vmatprep.subr.bf16.mxu0 0
          %879 = vmatpush1.bf16.msra.mxu0 %v860
          %880 = vmatprep.subr.bf16.mxu0 0
          %881 = vmatpush1.bf16.msra.mxu0 %v859
          %882 = vmatprep.subr.bf16.mxu0 0
          %883 = vmatpush1.bf16.msra.mxu0 %v858
          %884 = vmatprep.subr.bf16.mxu0 0
          %885 = vmatpush1.bf16.msra.mxu0 %v857
          %886 = vmatprep.subr.bf16.mxu0 0
          %887 = vmatpush1.bf16.msra.mxu0 %v856
          %888 = vmatprep.subr.bf16.mxu0 0
          %889 = vmatpush2.bf16.msra.mxu0 0
          %890 = vmatprep.subr.bf16.mxu0 0
          %891 = vmatpush2.bf16.msra.mxu0 0
          %892 = vmatprep.subr.bf16.mxu0 0
          %893 = vmatpush2.bf16.msra.mxu0 0
          %894 = vmatprep.subr.bf16.mxu0 0
          %895 = vmatpush2.bf16.msra.mxu0 0
          %896 = vmatprep.subr.bf16.mxu0 0
          %897 = vmatpush2.bf16.msra.mxu0 0
          %898 = vmatprep.subr.bf16.mxu0 0
          %899 = vmatpush2.bf16.msra.mxu0 0
          %900 = vmatprep.subr.bf16.mxu0 0
          %901 = vmatpush2.bf16.msra.mxu0 0
          %902 = vmatprep.subr.bf16.mxu0 0
          %903 = vmatpush2.bf16.msra.mxu0 0
          %904 = vmatprep.mubr.bf16.mxu0 0
          %905 = vmatmul.mubr.bf16.gmra.mxu0 %v799
          %v906 = vpop.f32.mrf.mxu0
          %v907 = vadd.f32 %v822, %v906
          %v908 = vpop.f32.mrf.mxu0
          %v909 = vpop.f32.mrf.mxu0
          %v910 = vadd.f32 %v822, %v909
          %v911 = vpop.f32.mrf.mxu0
          %912 = vmatprep.mubr.bf16.mxu0 0
          %913 = vmatmul.mubr.bf16.gmra.mxu0 %v800
          %v914 = vpop.f32.mrf.mxu0
          %v915 = vadd.f32 %v822, %v914
          %v916 = vpop.f32.mrf.mxu0
          %v917 = vpop.f32.mrf.mxu0
          %v918 = vadd.f32 %v822, %v917
          %v919 = vpop.f32.mrf.mxu0
          %920 = vdwg.mxu0
          %921 = vst [vmem:[%s10] sm:$0xff] %v907
          %922 = vst [vmem:[%s10 + $0x8] sm:$0xff] %v910
          %923 = vst [vmem:[%s10 + $0x10] sm:$0xff] %v915
          %924 = vst [vmem:[%s10 + $0x18] sm:$0xff] %v918
        $region84: #{forward.1} parent=43 // pred_fallthru
          _
        // Predicated region
        $region85: #{forward.1} parent=43 // pred_check
          %p925 = pneg %p216
        $region86: #{forward.1} parent=43 // pred_check_branch
          %927 = sbr.rel (%p925) target = $region88
        $region87: #{forward.1} parent=43 // pred_region
          _
        $region88: #{forward.1} parent=43 // pred_fallthru
          _
        // Predicated region
        $region89: #{forward.1} parent=43 // pred_check
          %p928 = pneg %p216
        $region90: #{forward.1} parent=43 // pred_check_branch
          %930 = sbr.rel (%p928) target = $region92
        $region91: #{forward.1} parent=43 // pred_region
          _
        $region92: #{forward.1} parent=43 // pred_fallthru
          _
      $region44: #{forward.1} parent=5 // pred_fallthru
        _
      %p931 = scmp.le.s32.totalorder 2, %s41
      // Predicated region
      $region93: #{forward.1} parent=5 // pred_check
        %p932 = pneg %p931
      $region94: #{forward.1} parent=5 // pred_check_branch
        %934 = sbr.rel (%p932) target = $region96
      $region95: #{forward.1} parent=5 // pred_region
        %s935 = ssub.s32 %s41, 2
      $region96: #{forward.1} parent=5 // pred_fallthru
        _
    $region6: #{forward.1} parent=1 // loop_footer
      %s45 = sadd.s32 1, %s41
    $region7: #{forward.1} parent=1 // loop_footer_branch
      %40 = sbr.rel target = $region3
    $region8: #{forward.1} parent=1 // loop_exit
      _
    %936 = vsyncpa [#allocation9], 1
    %s937 = scalar_lea.sflag [#allocation9], 1
    %938 = vsyncpa %s937, 1
    %939 = vsyncpa [#allocation11], 1
    %s940 = scalar_lea.sflag [#allocation11], 1
    %941 = vsyncpa %s940, 1
    %942 = vsyncpa [#allocation14], 1
    %s943 = scalar_lea.sflag [#allocation14], 1
    %944 = vsyncpa %s943, 1

</llo_original>
